<compile_context>
chip_gen: v5e
topology: v5e:2x2
jax: 0.10.0
libtpu: 0.0.40
codegen_flags: <defaults>
</compile_context>

<pallas_src>
import functools

import jax
import jax.numpy as jnp
from jax import lax
from jax.experimental import pallas as pl
from jax.experimental.pallas import tpu as pltpu


def _round_up(x, m):
    return ((x + m - 1) // m) * m


def _fused_cnn_kernel(x_ref, w_ref, b_ref, o_ref, *,
                      kernel_sizes, F, S_valid, S_pad, TB, use_roll):
    """One batch tile: fused conv (all branches) + time max-pool + bias + ReLU.

    x_ref: (TB, S_pad, D)        compute dtype (bf16 by default)
    w_ref: (D, sum_i K_i * F)    compute dtype -- all taps of all branches on columns
    b_ref: (1, F * num_branches) f32
    o_ref: (TB, F * num_branches)
    """
    x = x_ref[...]
    D = x.shape[-1]
    # Single MXU matmul with all taps of all branches packed along N; f32 accumulation.
    y = jnp.dot(x.reshape(TB * S_pad, D), w_ref[...],
                preferred_element_type=jnp.float32)
    tot_cols = y.shape[-1]
    y = y.reshape(TB, S_pad, tot_cols)        # zero-cost view: S_pad % 8 == 0

    if use_roll:
        # Hoisted time-position iota, reused by every branch's validity mask.
        time_idx = lax.broadcasted_iota(jnp.int32, (TB, S_pad, F), 1)

    pooled = []
    off = 0
    for K in kernel_sizes:                    # static unroll over branches
        L = S_valid - K + 1                   # number of valid conv positions
        if use_roll:
            # conv[b, l, f] = sum_j y[b, l + j, off + j*F + f]
            # Taps combined with XLU sublane rolls (no sublane-offset slices, hence no
            # per-tap relayout copy of the slab); wrapped / padded time positions
            # (l >= L) are masked to -inf before the max.
            acc = y[:, :, off:off + F]
            for j in range(1, K):             # static unroll over taps
                tap = y[:, :, off + j * F:off + (j + 1) * F]
                acc = acc + pltpu.roll(tap, shift=S_pad - j, axis=1)
            acc = jnp.where(time_idx < L, acc, -jnp.inf)
            pooled.append(jnp.max(acc, axis=1))          # (TB, F)
        else:
            # Conservative fallback: shifted-slice adds (correct, may relayout per tap).
            acc = y[:, 0:L, off:off + F]
            for j in range(1, K):
                acc = acc + y[:, j:j + L, off + j * F:off + (j + 1) * F]
            pooled.append(jnp.max(acc, axis=1))
        off += K * F

    out = jnp.concatenate(pooled, axis=-1)    # (TB, F * num_branches)
    # Bias + ReLU folded AFTER the pool: exact because ReLU is monotone and the bias is
    # position-independent (max_l relu(a_l + b) == relu(max_l a_l + b)).
    out = jnp.maximum(out + b_ref[...], 0.0)
    o_ref[...] = out.astype(o_ref.dtype)


def _vmem_capacity_bytes():
    try:
        info = pltpu.get_tpu_info()
        cap = getattr(info, "vmem_capacity_bytes", None)
        if cap:
            return int(cap)
    except Exception:
        pass
    return 128 << 20


def cnn_text_forward(text_embed, conv_weights, conv_biases, *,
                     compute_dtype=jnp.bfloat16):
    """CNNText.forward with every kernel size fused into one pallas_call.

    text_embed: (B, S, D)
    conv_weights[i]: (K_i, D, F)   (torch Conv2d weight (F, 1, K_i, D) permuted)
    conv_biases[i]:  (1, F)
    Returns (B, F * num_branches) in text_embed's dtype.
    """
    B, S, D = map(int, text_embed.shape)
    F = int(conv_weights[0].shape[-1])
    kernel_sizes = tuple(int(w.shape[0]) for w in conv_weights)
    assert all(int(w.shape[1]) == D and int(w.shape[2]) == F for w in conv_weights)
    assert max(kernel_sizes) <= S, "seq_len must be >= every kernel size"

    out_dtype = text_embed.dtype
    f_out = F * len(kernel_sizes)

    # Pack all taps of all branches along the matmul N dimension, in the MXU compute
    # dtype.  NOTE: for tiny F (e.g. 8) the packed layout is deliberately NOT padded to
    # 128-lane groups -- 40 columns fit one MXU pass; padding would multiply passes.
    w_all = jnp.concatenate(
        [jnp.transpose(w, (1, 0, 2)).reshape(D, -1) for w in conv_weights],
        axis=-1).astype(compute_dtype)
    b_all = jnp.concatenate([b.reshape(1, F) for b in conv_biases],
                            axis=-1).astype(jnp.float32)
    tot_cols = int(w_all.shape[-1])          # sum_i K_i * F

    # Pad S to a multiple of 8 so the in-kernel (TB*S, D) <-> (TB, S, tot_cols) reshapes
    # stay zero-cost sublane-aligned views.  Padded rows never reach the output: each
    # branch masks time positions >= S - K + 1 before its max.
    S_pad = _round_up(S, 8)
    x = text_embed.astype(compute_dtype)
    if S_pad != S:
        x = jnp.pad(x, ((0, 0), (0, S_pad - S), (0, 0)))

    in_bytes = jnp.dtype(compute_dtype).itemsize
    out_bytes = jnp.dtype(out_dtype).itemsize

    # ---- VMEM-budgeted batch tile (portable: v5e/v6e 128 MiB, v7x 64 MiB / 2 TCs) ----
    vmem_phys = _vmem_capacity_bytes()
    num_tc = 2 if vmem_phys <= (64 << 20) else 1   # v7x heuristic

    def vmem_need(tb):
        x_b = 2 * tb * S_pad * D * in_bytes        # double-buffered input tile
        w_b = D * tot_cols * in_bytes              # weights (single-buffered)
        y_b = 2 * tb * S_pad * tot_cols * 4        # f32 matmul slab + relayout headroom
        a_b = 2 * tb * S_pad * F * 4               # per-branch accumulator + mask select
        o_b = 2 * tb * f_out * out_bytes           # double-buffered output tile
        return x_b + w_b + y_b + a_b + o_b + (1 << 20)

    budget = vmem_phys // 4
    cap = max(8, min(512, _round_up(B, 8)))
    TB = 8
    t = 16
    while t <= cap and vmem_need(t) <= budget:
        TB = t
        t += 8
    if num_tc > 1 and B > 8:
        # Give both v7x TensorCores work: at least `num_tc` grid steps.
        TB = min(TB, max(8, _round_up(-(-B // num_tc), 8)))
    if TB >= B:
        TB = B                                     # single full-batch block
    grid = (pl.cdiv(B, TB),)

    vmem_limit = int(min(vmem_phys // 2, max(32 << 20, 2 * vmem_need(TB))))

    kernel_roll = functools.partial(
        _fused_cnn_kernel, kernel_sizes=kernel_sizes, F=F,
        S_valid=S, S_pad=S_pad, TB=TB, use_roll=True)
    kernel_slice = functools.partial(
        _fused_cnn_kernel, kernel_sizes=kernel_sizes, F=F,
        S_valid=S, S_pad=S_pad, TB=TB, use_roll=False)

    cost = pl.CostEstimate(
        flops=2 * B * S_pad * D * tot_cols,
        transcendentals=0,
        bytes_accessed=(B * S_pad * D * in_bytes + D * tot_cols * in_bytes
                        + B * f_out * out_bytes))

    def build(body, single_buffer_consts):
        const_kw = dict(pipeline_mode=pl.Buffered(1)) if single_buffer_consts else {}
        return pl.pallas_call(
            body,
            out_shape=jax.ShapeDtypeStruct((B, f_out), out_dtype),
            grid=grid,
            in_specs=[
                pl.BlockSpec((TB, S_pad, D), lambda i: (i, 0, 0)),
                pl.BlockSpec((D, tot_cols), lambda i: (0, 0), **const_kw),
                pl.BlockSpec((1, f_out), lambda i: (0, 0), **const_kw),
            ],
            out_specs=pl.BlockSpec((TB, f_out), lambda i: (i, 0)),
            compiler_params=pltpu.CompilerParams(
                dimension_semantics=("parallel",),
                vmem_limit_bytes=vmem_limit),
            cost_estimate=cost,
        )

    # TODO(synk): for very long S, add a trailing "arbitrary" S-chunk grid axis with a
    # (max(K)-1)-row halo and a (TB, f_out) running-max scratch so the f32 y slab stays
    # constant-size in VMEM; not needed at these shapes.
    try:
        # Preferred path: XLU rolls + single-buffered constant operands.
        return build(kernel_roll, True)(x, w_all, b_all)
    except Exception:
        # Conservative fallback if pl.Buffered / pltpu.roll lowering is unavailable.
        return build(kernel_slice, False)(x, w_all, b_all)


def sequential_repr_cnn_forward(text_embed, conv_weights, conv_biases):
    """SequentialRepr.forward for mode='cnn'. Returns (hiddens, output)."""
    # TODO(synk): gru/lstm (+att/avg) modes of SequentialRepr are unused for mode='cnn'
    # and are not implemented; CNNText.dropout is defined but never applied in forward.
    output = cnn_text_forward(text_embed, conv_weights, conv_biases)
    return None, output


def _reference_forward(text_embed, conv_weights, conv_biases, quantize_dtype=None):
    """Pure-JAX reference (full-precision math) for the self-test."""
    x = text_embed.astype(jnp.float32)
    if quantize_dtype is not None:
        x = x.astype(quantize_dtype).astype(jnp.float32)
    outs = []
    for w, b in zip(conv_weights, conv_biases):
        K, _, F = w.shape
        wf = w.astype(jnp.float32)
        if quantize_dtype is not None:
            wf = w.astype(quantize_dtype).astype(jnp.float32)
        S = x.shape[1]
        L = S - K + 1
        acc = jnp.zeros((x.shape[0], L, F), jnp.float32)
        for j in range(K):
            acc = acc + jnp.einsum("bld,df->blf", x[:, j:j + L, :], wf[j],
                                   precision=lax.Precision.HIGHEST)
        acc = jnp.maximum(acc + b.astype(jnp.float32)[None, :, :], 0.0)
        outs.append(jnp.max(acc, axis=1))
    return jnp.concatenate(outs, axis=-1)


if __name__ == "__main__":
    # Small config consistent with the module:
    #   config.kernel_sizes = "2,3", config.num_filters = 8, config.embed_dim = 32
    kernel_sizes = [2, 3]
    num_filters = 8
    embed_dim = 32
    batch = 2
    seq = 8

    key = jax.random.PRNGKey(0)
    kx, *kws = jax.random.split(key, 1 + 2 * len(kernel_sizes))

    text_embed = jax.random.normal(kx, (batch, seq, embed_dim), dtype=jnp.float32)

    conv_weights, conv_biases = [], []
    for i, k in enumerate(kernel_sizes):
        # torch Conv2d(1, F, (k, D)) weight is (F, 1, k, D); stored here as (k, D, F).
        w = 0.1 * jax.random.normal(kws[2 * i], (k, embed_dim, num_filters),
                                    dtype=jnp.float32)
        b = 0.1 * jax.random.normal(kws[2 * i + 1], (1, num_filters),
                                    dtype=jnp.float32)
        conv_weights.append(w)
        conv_biases.append(b)

    hiddens, output = sequential_repr_cnn_forward(text_embed, conv_weights, conv_biases)
    output = jax.block_until_ready(output)

    assert hiddens is None
    assert output.shape == (batch, num_filters * len(kernel_sizes))

    # Tight structural check: identical bf16-quantized operands, exact f32 reference math.
    ref_q = _reference_forward(text_embed, conv_weights, conv_biases,
                               quantize_dtype=jnp.bfloat16)
    assert jnp.allclose(output, ref_q, atol=2e-3, rtol=2e-3), \
        float(jnp.max(jnp.abs(output - ref_q)))

    # Fidelity check vs the full-f32 torch math (bf16 MXU operands -> loosened tolerance).
    ref = _reference_forward(text_embed, conv_weights, conv_biases)
    assert jnp.allclose(output, ref, atol=5e-2, rtol=5e-2), \
        float(jnp.max(jnp.abs(output - ref)))

    print("KERNEL_OK")
</pallas_src>

<mosaic_0001>
module attributes {stable_mosaic.version = 11 : i64} {
  func.func @_fused_cnn_kernel(%arg0: i32, %arg1: memref<2x8x32xbf16, #tpu.memory_space<vmem>>, %arg2: memref<32x40xbf16, #tpu.memory_space<vmem>>, %arg3: memref<1x16xf32, #tpu.memory_space<vmem>>, %arg4: memref<2x16xf32, #tpu.memory_space<vmem>>) attributes {dimension_semantics = [#tpu.dimension_semantics<parallel>], iteration_bounds = array<i64: 1>, scalar_prefetch = 0 : i64, scratch_operands = 0 : i64, tpu.core_type = #tpu.core_type<tc>, window_params = [{transform_indices = @transform_0, window_bounds = array<i64: 2, 8, 32>}, {pipeline_mode = #tpu.pipeline_mode<synchronous>, transform_indices = @transform_1, window_bounds = array<i64: 32, 40>}, {pipeline_mode = #tpu.pipeline_mode<synchronous>, transform_indices = @transform_2, window_bounds = array<i64: 1, 16>}, {transform_indices = @transform_3, window_bounds = array<i64: 2, 16>}]} {
    %c0 = arith.constant 0 : index
    %c0_0 = arith.constant 0 : index
    %c0_1 = arith.constant 0 : index
    %0 = vector.load %arg1[%c0, %c0_0, %c0_1] : memref<2x8x32xbf16, #tpu.memory_space<vmem>>, vector<2x8x32xbf16>
    %1 = vector.shape_cast %0 : vector<2x8x32xbf16> to vector<16x32xbf16>
    %c0_2 = arith.constant 0 : index
    %c0_3 = arith.constant 0 : index
    %2 = vector.load %arg2[%c0_2, %c0_3] : memref<32x40xbf16, #tpu.memory_space<vmem>>, vector<32x40xbf16>
    %cst = arith.constant dense<0.000000e+00> : vector<16x40xf32>
    %3 = tpu.matmul %1, %2, %cst {dimension_numbers = #tpu.dot_dimension_numbers<[1], [0], [0], [1], [0, 0, 1, 1], [], []>} : vector<16x32xbf16>, vector<32x40xbf16>, vector<16x40xf32> -> vector<16x40xf32>
    %4 = vector.shape_cast %3 : vector<16x40xf32> to vector<2x8x40xf32>
    %5 = tpu.iota {dimensions = array<i32: 1>} : vector<2x8x8xi32>
    %6 = vector.extract_strided_slice %4 {offsets = [0, 0, 0], sizes = [2, 8, 8], strides = [1, 1, 1]} : vector<2x8x40xf32> to vector<2x8x8xf32>
    %7 = vector.extract_strided_slice %4 {offsets = [0, 0, 8], sizes = [2, 8, 8], strides = [1, 1, 1]} : vector<2x8x40xf32> to vector<2x8x8xf32>
    %c7_i32 = arith.constant 7 : i32
    %8 = tpu.dynamic_rotate %7 by %c7_i32 dim 1 : vector<2x8x8xf32>, i32 -> vector<2x8x8xf32>
    %9 = arith.addf %6, %8 : vector<2x8x8xf32>
    %c7_i32_4 = arith.constant 7 : i32
    %10 = vector.broadcast %c7_i32_4 : i32 to vector<2x8x8xi32>
    %11 = arith.cmpi slt, %5, %10 : vector<2x8x8xi32>
    %cst_5 = arith.constant 0xFF800000 : f32
    %12 = vector.broadcast %cst_5 : f32 to vector<2x8x8xf32>
    %13 = arith.select %11, %9, %12 : vector<2x8x8xi1>, vector<2x8x8xf32>
    %cst_6 = arith.constant dense<0xFF800000> : vector<2x8xf32>
    %14 = vector.multi_reduction <maximumf>, %13, %cst_6 [1] : vector<2x8x8xf32> to vector<2x8xf32>
    %15 = vector.extract_strided_slice %4 {offsets = [0, 0, 16], sizes = [2, 8, 8], strides = [1, 1, 1]} : vector<2x8x40xf32> to vector<2x8x8xf32>
    %16 = vector.extract_strided_slice %4 {offsets = [0, 0, 24], sizes = [2, 8, 8], strides = [1, 1, 1]} : vector<2x8x40xf32> to vector<2x8x8xf32>
    %c7_i32_7 = arith.constant 7 : i32
    %17 = tpu.dynamic_rotate %16 by %c7_i32_7 dim 1 : vector<2x8x8xf32>, i32 -> vector<2x8x8xf32>
    %18 = arith.addf %15, %17 : vector<2x8x8xf32>
    %19 = vector.extract_strided_slice %4 {offsets = [0, 0, 32], sizes = [2, 8, 8], strides = [1, 1, 1]} : vector<2x8x40xf32> to vector<2x8x8xf32>
    %c6_i32 = arith.constant 6 : i32
    %20 = tpu.dynamic_rotate %19 by %c6_i32 dim 1 : vector<2x8x8xf32>, i32 -> vector<2x8x8xf32>
    %21 = arith.addf %18, %20 : vector<2x8x8xf32>
    %c6_i32_8 = arith.constant 6 : i32
    %22 = vector.broadcast %c6_i32_8 : i32 to vector<2x8x8xi32>
    %23 = arith.cmpi slt, %5, %22 : vector<2x8x8xi32>
    %cst_9 = arith.constant 0xFF800000 : f32
    %24 = vector.broadcast %cst_9 : f32 to vector<2x8x8xf32>
    %25 = arith.select %23, %21, %24 : vector<2x8x8xi1>, vector<2x8x8xf32>
    %cst_10 = arith.constant dense<0xFF800000> : vector<2x8xf32>
    %26 = vector.multi_reduction <maximumf>, %25, %cst_10 [1] : vector<2x8x8xf32> to vector<2x8xf32>
    %27 = tpu.concatenate %14, %26 in 1 : vector<2x8xf32>, vector<2x8xf32> -> vector<2x16xf32>
    %c0_11 = arith.constant 0 : index
    %c0_12 = arith.constant 0 : index
    %28 = vector.load %arg3[%c0_11, %c0_12] : memref<1x16xf32, #tpu.memory_space<vmem>>, vector<1x16xf32>
    %29 = vector.broadcast %28 : vector<1x16xf32> to vector<2x16xf32>
    %30 = arith.addf %27, %29 : vector<2x16xf32>
    %cst_13 = arith.constant 0.000000e+00 : f32
    %31 = vector.broadcast %cst_13 : f32 to vector<2x16xf32>
    %32 = arith.maximumf %30, %31 : vector<2x16xf32>
    %c0_14 = arith.constant 0 : index
    %c0_15 = arith.constant 0 : index
    %33 = vector.load %arg4[%c0_14, %c0_15] : memref<2x16xf32, #tpu.memory_space<vmem>>, vector<2x16xf32>
    tpu.vector_store %arg4[%c0_14, %c0_15], %32 {strides = array<i32>} : memref<2x16xf32, #tpu.memory_space<vmem>>, vector<2x16xf32>,
    return
  }
  func.func @transform_0(%arg0: i32) -> (i32, i32, i32) {
    %c0_i32 = arith.constant 0 : i32
    %c0_i32_0 = arith.constant 0 : i32
    %c0_i32_1 = arith.constant 0 : i32
    return %arg0, %c0_i32, %c0_i32_0 : i32, i32, i32
  }
  func.func @transform_1(%arg0: i32) -> (i32, i32) {
    %c0_i32 = arith.constant 0 : i32
    %c0_i32_0 = arith.constant 0 : i32
    %c0_i32_1 = arith.constant 0 : i32
    return %c0_i32, %c0_i32_0 : i32, i32
  }
  func.func @transform_2(%arg0: i32) -> (i32, i32) {
    %c0_i32 = arith.constant 0 : i32
    %c0_i32_0 = arith.constant 0 : i32
    %c0_i32_1 = arith.constant 0 : i32
    return %c0_i32, %c0_i32_0 : i32, i32
  }
  func.func @transform_3(%arg0: i32) -> (i32, i32) {
    %c0_i32 = arith.constant 0 : i32
    %c0_i32_0 = arith.constant 0 : i32
    return %arg0, %c0_i32 : i32, i32
  }
}

module attributes {stable_mosaic.version = 11 : i64} {
  func.func @_fused_cnn_kernel(%arg0: i32, %arg1: memref<2x8x32xbf16, #tpu.memory_space<vmem>>, %arg2: memref<32x40xbf16, #tpu.memory_space<vmem>>, %arg3: memref<1x16xf32, #tpu.memory_space<vmem>>, %arg4: memref<2x16xf32, #tpu.memory_space<vmem>>) attributes {dimension_semantics = [#tpu.dimension_semantics<parallel>], iteration_bounds = array<i64: 1>, scalar_prefetch = 0 : i64, scratch_operands = 0 : i64, tpu.core_type = #tpu.core_type<tc>, window_params = [{transform_indices = @transform_0, window_bounds = array<i64: 2, 8, 32>}, {pipeline_mode = #tpu.pipeline_mode<synchronous>, transform_indices = @transform_1, window_bounds = array<i64: 32, 40>}, {pipeline_mode = #tpu.pipeline_mode<synchronous>, transform_indices = @transform_2, window_bounds = array<i64: 1, 16>}, {transform_indices = @transform_3, window_bounds = array<i64: 2, 16>}]} {
    %c0 = arith.constant 0 : index
    %c0_0 = arith.constant 0 : index
    %c0_1 = arith.constant 0 : index
    %0 = vector.load %arg1[%c0, %c0_0, %c0_1] : memref<2x8x32xbf16, #tpu.memory_space<vmem>>, vector<2x8x32xbf16>
    %1 = vector.shape_cast %0 : vector<2x8x32xbf16> to vector<16x32xbf16>
    %c0_2 = arith.constant 0 : index
    %c0_3 = arith.constant 0 : index
    %2 = vector.load %arg2[%c0_2, %c0_3] : memref<32x40xbf16, #tpu.memory_space<vmem>>, vector<32x40xbf16>
    %cst = arith.constant dense<0.000000e+00> : vector<16x40xf32>
    %3 = tpu.matmul %1, %2, %cst {dimension_numbers = #tpu.dot_dimension_numbers<[1], [0], [0], [1], [0, 0, 1, 1], [], []>} : vector<16x32xbf16>, vector<32x40xbf16>, vector<16x40xf32> -> vector<16x40xf32>
    %4 = vector.shape_cast %3 : vector<16x40xf32> to vector<2x8x40xf32>
    %5 = vector.extract_strided_slice %4 {offsets = [0, 0, 0], sizes = [2, 7, 8], strides = [1, 1, 1]} : vector<2x8x40xf32> to vector<2x7x8xf32>
    %6 = vector.extract_strided_slice %4 {offsets = [0, 1, 8], sizes = [2, 7, 8], strides = [1, 1, 1]} : vector<2x8x40xf32> to vector<2x7x8xf32>
    %7 = arith.addf %5, %6 : vector<2x7x8xf32>
    %cst_4 = arith.constant dense<0xFF800000> : vector<2x8xf32>
    %8 = vector.multi_reduction <maximumf>, %7, %cst_4 [1] : vector<2x7x8xf32> to vector<2x8xf32>
    %9 = vector.extract_strided_slice %4 {offsets = [0, 0, 16], sizes = [2, 6, 8], strides = [1, 1, 1]} : vector<2x8x40xf32> to vector<2x6x8xf32>
    %10 = vector.extract_strided_slice %4 {offsets = [0, 1, 24], sizes = [2, 6, 8], strides = [1, 1, 1]} : vector<2x8x40xf32> to vector<2x6x8xf32>
    %11 = arith.addf %9, %10 : vector<2x6x8xf32>
    %12 = vector.extract_strided_slice %4 {offsets = [0, 2, 32], sizes = [2, 6, 8], strides = [1, 1, 1]} : vector<2x8x40xf32> to vector<2x6x8xf32>
    %13 = arith.addf %11, %12 : vector<2x6x8xf32>
    %cst_5 = arith.constant dense<0xFF800000> : vector<2x8xf32>
    %14 = vector.multi_reduction <maximumf>, %13, %cst_5 [1] : vector<2x6x8xf32> to vector<2x8xf32>
    %15 = tpu.concatenate %8, %14 in 1 : vector<2x8xf32>, vector<2x8xf32> -> vector<2x16xf32>
    %c0_6 = arith.constant 0 : index
    %c0_7 = arith.constant 0 : index
    %16 = vector.load %arg3[%c0_6, %c0_7] : memref<1x16xf32, #tpu.memory_space<vmem>>, vector<1x16xf32>
    %17 = vector.broadcast %16 : vector<1x16xf32> to vector<2x16xf32>
    %18 = arith.addf %15, %17 : vector<2x16xf32>
    %cst_8 = arith.constant 0.000000e+00 : f32
    %19 = vector.broadcast %cst_8 : f32 to vector<2x16xf32>
    %20 = arith.maximumf %18, %19 : vector<2x16xf32>
    %c0_9 = arith.constant 0 : index
    %c0_10 = arith.constant 0 : index
    %21 = vector.load %arg4[%c0_9, %c0_10] : memref<2x16xf32, #tpu.memory_space<vmem>>, vector<2x16xf32>
    tpu.vector_store %arg4[%c0_9, %c0_10], %20 {strides = array<i32>} : memref<2x16xf32, #tpu.memory_space<vmem>>, vector<2x16xf32>,
    return
  }
  func.func @transform_0(%arg0: i32) -> (i32, i32, i32) {
    %c0_i32 = arith.constant 0 : i32
    %c0_i32_0 = arith.constant 0 : i32
    %c0_i32_1 = arith.constant 0 : i32
    return %arg0, %c0_i32, %c0_i32_0 : i32, i32, i32
  }
  func.func @transform_1(%arg0: i32) -> (i32, i32) {
    %c0_i32 = arith.constant 0 : i32
    %c0_i32_0 = arith.constant 0 : i32
    %c0_i32_1 = arith.constant 0 : i32
    return %c0_i32, %c0_i32_0 : i32, i32
  }
  func.func @transform_2(%arg0: i32) -> (i32, i32) {
    %c0_i32 = arith.constant 0 : i32
    %c0_i32_0 = arith.constant 0 : i32
    %c0_i32_1 = arith.constant 0 : i32
    return %c0_i32, %c0_i32_0 : i32, i32
  }
  func.func @transform_3(%arg0: i32) -> (i32, i32) {
    %c0_i32 = arith.constant 0 : i32
    %c0_i32_0 = arith.constant 0 : i32
    return %arg0, %c0_i32 : i32, i32
  }
}

</mosaic_0001>

<llo_original>
// kernel: tpu_custom_call.1
$region0: #{tpu_custom_call.1}
  #allocation0 [shape = 'u32[]', space=smem, size = 0x4, offset = 0x4, fixed_abs, tag = 'smem constant byte address 0x4 - core index']
  #allocation1 [shape = 'u32[72,128]{1,0:T(1,128)}', space=vmem, size = 0x9000, scoped, tag = 'internal scratch']
  %s0 = inlined_call_operand.hbm [shape: bf16[2,8,32], index: 0, kind: input, shape index: {}]
  %s1 = inlined_call_operand.hbm [shape: bf16[32,40], index: 1, kind: input, shape index: {}]
  %s2 = inlined_call_operand.vmem [shape: f32[1,16], index: 2, kind: input, shape index: {}]
  %s3 = inlined_call_operand.hbm [shape: f32[2,16], index: 3, kind: output, shape index: {}]
  %s4 = sld [smem:[#allocation0]]
  $region30: #{tpu_custom_call.1} parent=0
    _
  %s6 = ssub.s32 1, %s4
  %s7 = scalar_select 0, %s6, %s4
  $region1: #{tpu_custom_call.1} parent=0
    #allocation2 [shape = 'u8[4096]{0}', space=vmem, size = 0x1000, scoped, tag = 'input window, operand 0, single buffered']
    #allocation3 [shape = 's32[1]{0}', space=sflag, size = 0x4, scoped, tag = 'scoped memory for tpu_custom_call.1']
    #allocation4 [shape = 's32[1]{0}', space=sflag, size = 0x4, scoped, tag = 'scoped memory for tpu_custom_call.1']
    #allocation5 [shape = 'u8[8192]{0}', space=vmem, size = 0x2000, scoped, tag = 'input window, operand 1, single buffered']
    #allocation6 [shape = 's32[1]{0}', space=sflag, size = 0x4, scoped, tag = 'scoped memory for tpu_custom_call.1']
    #allocation7 [shape = 'u8[1024]{0}', space=vmem, size = 0x400, scoped, tag = 'output window, operand 0, single buffered']
    %8 = vsyncpa [#allocation3], 0
    %9 = vsyncpa [#allocation6], 0
    %10 = vsyncpa [#allocation4], 0
    // Predicated region
    $region2: #{tpu_custom_call.1} parent=1 // pred_check
      _
    $region3: #{tpu_custom_call.1} parent=1 // pred_check_branch
      %12 = sbr.rel (0) target = $region5
    $region4: #{tpu_custom_call.1} parent=1 // pred_region
      %14 = vsyncadd [#allocation3], 0
      %s15 = sshll.u32 %s0, 4
      %s16 = int_to_ptr.hbm [resolvable:$true] %s15
      %s17 = sshll.u32 [#allocation2], 4
      %s18 = int_to_ptr.vmem [resolvable:$true] %s17
      %23 = dma.hbm_to_vmem [thread:$0]  %s16, 128, %s18, [#allocation3], 64, 64, 4
    $region5: #{tpu_custom_call.1} parent=1 // pred_fallthru
      _
    // Predicated region
    $region6: #{tpu_custom_call.1} parent=1 // pred_check
      _
    $region7: #{tpu_custom_call.1} parent=1 // pred_check_branch
      %25 = sbr.rel (0) target = $region9
    $region8: #{tpu_custom_call.1} parent=1 // pred_region
      %27 = vsyncadd [#allocation6], 0
      %s28 = sshll.u32 %s1, 4
      %s29 = int_to_ptr.hbm [resolvable:$true] %s28
      %s30 = sshll.u32 [#allocation5], 4
      %s31 = int_to_ptr.vmem [resolvable:$true] %s30
      %36 = dma.hbm_to_vmem [thread:$0]  %s29, 256, %s31, [#allocation6], 64, 64, 4
    $region9: #{tpu_custom_call.1} parent=1 // pred_fallthru
      _
    // Predicated region
    $region10: #{tpu_custom_call.1} parent=1 // pred_check
      _
    $region11: #{tpu_custom_call.1} parent=1 // pred_check_branch
      %38 = sbr.rel (0) target = $region13
    $region12: #{tpu_custom_call.1} parent=1 // pred_region
      _
    $region13: #{tpu_custom_call.1} parent=1 // pred_fallthru
      _
    // Predicated region
    $region14: #{tpu_custom_call.1} parent=1 // pred_check
      _
    $region15: #{tpu_custom_call.1} parent=1 // pred_check_branch
      %40 = sbr.rel (0) target = $region17
    $region16: #{tpu_custom_call.1} parent=1 // pred_region
      %42 = dma.done [#allocation3], 128
    $region17: #{tpu_custom_call.1} parent=1 // pred_fallthru
      _
    // Predicated region
    $region18: #{tpu_custom_call.1} parent=1 // pred_check
      _
    $region19: #{tpu_custom_call.1} parent=1 // pred_check_branch
      %44 = sbr.rel (0) target = $region21
    $region20: #{tpu_custom_call.1} parent=1 // pred_region
      %46 = dma.done [#allocation6], 256
    $region21: #{tpu_custom_call.1} parent=1 // pred_fallthru
      _
    %v48 = vld [vmem:[#allocation2] sm:$0xf]
    %v49 = vld [vmem:[#allocation2 + $0x4] sm:$0xf]
    %v50 = vld [vmem:[#allocation5] sm:$0xf]
    %v51 = vld [vmem:[#allocation5 + $0x4] sm:$0xf]
    %v52 = vld [vmem:[#allocation5 + $0x8] sm:$0xf]
    %v53 = vld [vmem:[#allocation5 + $0xc] sm:$0xf]
    %v56 = vunpack.c.l.b16 %v48
    %v57 = vunpack.c.l.b16 %v49
    %v58 = vpack.c.b16 %v57, %v56
    %v63 = vunpack.c.l.b16 %v50
    %v64 = vunpack.c.l.b16 %v51
    %v65 = vunpack.c.l.b16 %v52
    %v66 = vunpack.c.l.b16 %v53
    %v67 = vpack.c.b16 %v64, %v63
    %v68 = vpack.c.b16 %v66, %v65
    %vm71 = vcmask 261120
    %v73 = vsel %vm71, %v58, 0
    %75 = vmatpush.bf16.msra.mxu0 0
    %76 = vmatpush.bf16.msra.mxu0 0
    %77 = vmatpush.bf16.msra.mxu0 0
    %78 = vmatpush.bf16.msra.mxu0 0
    %79 = vmatpush.bf16.msra.mxu0 0
    %80 = vmatpush.bf16.msra.mxu0 0
    %81 = vmatpush.bf16.msra.mxu0 %v68
    %82 = vmatpush.bf16.msra.mxu0 %v67
    %83 = vmatmul.bf16.gmra.mxu0 %v73
    %v84 = vpop.f32.mrf.mxu0
    %v85 = vadd.f32 0.0, %v84
    %v86 = vpop.f32.mrf.mxu0
    %v87 = vadd.f32 0.0, %v86
    %88 = vdwg.mxu0
    %v89 = vlaneseq
    %v90 = vshrl.u32 %v89, 7
    %93 = vrot.lane.b32.xlu0 %v85, 120
    %v94 = vpop.permute.xlu0 %93
    %95 = vrot.lane.b32.xlu0 %v87, 120
    %v96 = vpop.permute.xlu0 %95
    %v99 = vrot.slane %v94, 1
    %v100 = vrot.slane %v96, 1
    %v101 = vadd.f32 %v85, %v99
    %v102 = vadd.f32 %v87, %v100
    %vm103 = vcmp.lt.s32.totalorder %v90, 7
    %v104 = vsel %vm103, %v101, -inf
    %v105 = vsel %vm103, %v102, -inf
    %vm106 = vcmask 64512
    %v107 = vsel %vm106, %v104, -inf
    %v108 = vrot.slane %v107, 4
    %v109 = vmax.f32 %v107, %v108
    %v110 = vrot.slane %v109, 2
    %v111 = vmax.f32 %v109, %v110
    %v112 = vrot.slane %v111, 1
    %v113 = vmax.f32 %v111, %v112
    %v114 = vsel %vm106, %v105, -inf
    %v115 = vrot.slane %v114, 4
    %v116 = vmax.f32 %v114, %v115
    %v117 = vrot.slane %v116, 2
    %v118 = vmax.f32 %v116, %v117
    %v119 = vrot.slane %v118, 1
    %v120 = vmax.f32 %v118, %v119
    %121 = vrot.lane.b32.xlu0 %v85, 104
    %v122 = vpop.permute.xlu0 %121
    %123 = vrot.lane.b32.xlu0 %v87, 104
    %v124 = vpop.permute.xlu0 %123
    %v127 = vrot.slane %v122, 1
    %v128 = vrot.slane %v124, 1
    %131 = vrot.lane.b32.xlu0 %v127, 16
    %v132 = vpop.permute.xlu0 %131
    %133 = vrot.lane.b32.xlu0 %v128, 16
    %v134 = vpop.permute.xlu0 %133
    %v137 = vadd.f32 %v85, %v132
    %v138 = vadd.f32 %v87, %v134
    %139 = vrot.lane.b32.xlu0 %v85, 96
    %v140 = vpop.permute.xlu0 %139
    %141 = vrot.lane.b32.xlu0 %v87, 96
    %v142 = vpop.permute.xlu0 %141
    %v145 = vrot.slane %v140, 2
    %v146 = vrot.slane %v142, 2
    %149 = vrot.lane.b32.xlu0 %v145, 16
    %v150 = vpop.permute.xlu0 %149
    %151 = vrot.lane.b32.xlu0 %v146, 16
    %v152 = vpop.permute.xlu0 %151
    %v155 = vadd.f32 %v137, %v150
    %v156 = vadd.f32 %v138, %v152
    %vm157 = vcmp.lt.s32.totalorder %v90, 6
    %v158 = vsel %vm157, %v155, -inf
    %v159 = vsel %vm157, %v156, -inf
    %vm160 = vcmask 195712
    %v161 = vsel %vm160, %v158, -inf
    %v162 = vrot.slane %v161, 4
    %v163 = vmax.f32 %v161, %v162
    %v164 = vrot.slane %v163, 2
    %v165 = vmax.f32 %v163, %v164
    %v166 = vrot.slane %v165, 1
    %v167 = vmax.f32 %v165, %v166
    %v168 = vsel %vm160, %v159, -inf
    %v169 = vrot.slane %v168, 4
    %v170 = vmax.f32 %v168, %v169
    %v171 = vrot.slane %v170, 2
    %v172 = vmax.f32 %v170, %v171
    %v173 = vrot.slane %v172, 1
    %v174 = vmax.f32 %v172, %v173
    %vm177 = vcmask 1041409
    %v178 = vsel %vm177, %v120, %v113
    %v182 = vsel %vm177, %v174, %v167
    %183 = vrot.lane.b32.xlu0 %v182, 120
    %v184 = vpop.permute.xlu0 %183
    %v186 = vsel %vm106, %v178, %v184
    %v187 = vld [vmem:[%s2] sm:$0x1]
    %v189 = vperm.slane %v187, 0
    %v191 = vadd.f32 %v186, %v189
    %v192 = vmax.f32 %v191, 0.0
    %vm193 = vcmask 123904
    %194 = vst.msk [vmem:[#allocation7] sm:$0x3] %vm193, %v192
    // Predicated region
    $region22: #{tpu_custom_call.1} parent=1 // pred_check
      _
    $region23: #{tpu_custom_call.1} parent=1 // pred_check_branch
      %196 = sbr.rel (0) target = $region25
    $region24: #{tpu_custom_call.1} parent=1 // pred_region
      %198 = vsyncadd [#allocation4], 0
      %s200 = sshll.u32 [#allocation7], 4
      %s201 = int_to_ptr.vmem [resolvable:$true] %s200
      %s202 = sshll.u32 %s3, 4
      %s203 = int_to_ptr.hbm [resolvable:$true] %s202
      %205 = dma.vmem_to_hbm [thread:$0]  %s201, 32, %s203, [#allocation4]
    $region25: #{tpu_custom_call.1} parent=1 // pred_fallthru
      _
    // Predicated region
    $region26: #{tpu_custom_call.1} parent=1 // pred_check
      _
    $region27: #{tpu_custom_call.1} parent=1 // pred_check_branch
      %207 = sbr.rel (0) target = $region29
    $region28: #{tpu_custom_call.1} parent=1 // pred_region
      %209 = dma.done [#allocation4], 32
    $region29: #{tpu_custom_call.1} parent=1 // pred_fallthru
      _
    %210 = vsyncpa [#allocation3], 1
    %211 = vsyncpa [#allocation6], 1
    %212 = vsyncpa [#allocation4], 1

// kernel: tpu_custom_call.1
$region0: #{tpu_custom_call.1}
  #allocation0 [shape = 'u32[]', space=smem, size = 0x4, offset = 0x4, fixed_abs, tag = 'smem constant byte address 0x4 - core index']
  #allocation1 [shape = 'u32[72,128]{1,0:T(1,128)}', space=vmem, size = 0x9000, scoped, tag = 'internal scratch']
  %s0 = inlined_call_operand.hbm [shape: bf16[2,8,32], index: 0, kind: input, shape index: {}]
  %s1 = inlined_call_operand.hbm [shape: bf16[32,40], index: 1, kind: input, shape index: {}]
  %s2 = inlined_call_operand.vmem [shape: f32[1,16], index: 2, kind: input, shape index: {}]
  %s3 = inlined_call_operand.hbm [shape: f32[2,16], index: 3, kind: output, shape index: {}]
  %s4 = sld [smem:[#allocation0]]
  $region30: #{tpu_custom_call.1} parent=0
    _
  %s6 = ssub.s32 1, %s4
  %s7 = scalar_select 0, %s6, %s4
  $region1: #{tpu_custom_call.1} parent=0
    #allocation2 [shape = 'u8[4096]{0}', space=vmem, size = 0x1000, scoped, tag = 'input window, operand 0, single buffered']
    #allocation3 [shape = 's32[1]{0}', space=sflag, size = 0x4, scoped, tag = 'scoped memory for tpu_custom_call.1']
    #allocation4 [shape = 's32[1]{0}', space=sflag, size = 0x4, scoped, tag = 'scoped memory for tpu_custom_call.1']
    #allocation5 [shape = 'u8[8192]{0}', space=vmem, size = 0x2000, scoped, tag = 'input window, operand 1, single buffered']
    #allocation6 [shape = 's32[1]{0}', space=sflag, size = 0x4, scoped, tag = 'scoped memory for tpu_custom_call.1']
    #allocation7 [shape = 'u8[1024]{0}', space=vmem, size = 0x400, scoped, tag = 'output window, operand 0, single buffered']
    %8 = vsyncpa [#allocation3], 0
    %9 = vsyncpa [#allocation6], 0
    %10 = vsyncpa [#allocation4], 0
    // Predicated region
    $region2: #{tpu_custom_call.1} parent=1 // pred_check
      _
    $region3: #{tpu_custom_call.1} parent=1 // pred_check_branch
      %12 = sbr.rel (0) target = $region5
    $region4: #{tpu_custom_call.1} parent=1 // pred_region
      %14 = vsyncadd [#allocation3], 0
      %s15 = sshll.u32 %s0, 4
      %s16 = int_to_ptr.hbm [resolvable:$true] %s15
      %s17 = sshll.u32 [#allocation2], 4
      %s18 = int_to_ptr.vmem [resolvable:$true] %s17
      %23 = dma.hbm_to_vmem [thread:$0]  %s16, 128, %s18, [#allocation3], 64, 64, 4
    $region5: #{tpu_custom_call.1} parent=1 // pred_fallthru
      _
    // Predicated region
    $region6: #{tpu_custom_call.1} parent=1 // pred_check
      _
    $region7: #{tpu_custom_call.1} parent=1 // pred_check_branch
      %25 = sbr.rel (0) target = $region9
    $region8: #{tpu_custom_call.1} parent=1 // pred_region
      %27 = vsyncadd [#allocation6], 0
      %s28 = sshll.u32 %s1, 4
      %s29 = int_to_ptr.hbm [resolvable:$true] %s28
      %s30 = sshll.u32 [#allocation5], 4
      %s31 = int_to_ptr.vmem [resolvable:$true] %s30
      %36 = dma.hbm_to_vmem [thread:$0]  %s29, 256, %s31, [#allocation6], 64, 64, 4
    $region9: #{tpu_custom_call.1} parent=1 // pred_fallthru
      _
    // Predicated region
    $region10: #{tpu_custom_call.1} parent=1 // pred_check
      _
    $region11: #{tpu_custom_call.1} parent=1 // pred_check_branch
      %38 = sbr.rel (0) target = $region13
    $region12: #{tpu_custom_call.1} parent=1 // pred_region
      _
    $region13: #{tpu_custom_call.1} parent=1 // pred_fallthru
      _
    // Predicated region
    $region14: #{tpu_custom_call.1} parent=1 // pred_check
      _
    $region15: #{tpu_custom_call.1} parent=1 // pred_check_branch
      %40 = sbr.rel (0) target = $region17
    $region16: #{tpu_custom_call.1} parent=1 // pred_region
      %42 = dma.done [#allocation3], 128
    $region17: #{tpu_custom_call.1} parent=1 // pred_fallthru
      _
    // Predicated region
    $region18: #{tpu_custom_call.1} parent=1 // pred_check
      _
    $region19: #{tpu_custom_call.1} parent=1 // pred_check_branch
      %44 = sbr.rel (0) target = $region21
    $region20: #{tpu_custom_call.1} parent=1 // pred_region
      %46 = dma.done [#allocation6], 256
    $region21: #{tpu_custom_call.1} parent=1 // pred_fallthru
      _
    %v48 = vld [vmem:[#allocation2] sm:$0xf]
    %v49 = vld [vmem:[#allocation2 + $0x4] sm:$0xf]
    %v50 = vld [vmem:[#allocation5] sm:$0xf]
    %v51 = vld [vmem:[#allocation5 + $0x4] sm:$0xf]
    %v52 = vld [vmem:[#allocation5 + $0x8] sm:$0xf]
    %v53 = vld [vmem:[#allocation5 + $0xc] sm:$0xf]
    %v56 = vunpack.c.l.b16 %v48
    %v57 = vunpack.c.l.b16 %v49
    %v58 = vpack.c.b16 %v57, %v56
    %v63 = vunpack.c.l.b16 %v50
    %v64 = vunpack.c.l.b16 %v51
    %v65 = vunpack.c.l.b16 %v52
    %v66 = vunpack.c.l.b16 %v53
    %v67 = vpack.c.b16 %v64, %v63
    %v68 = vpack.c.b16 %v66, %v65
    %vm71 = vcmask 261120
    %v73 = vsel %vm71, %v58, 0
    %75 = vmatpush.bf16.msra.mxu0 0
    %76 = vmatpush.bf16.msra.mxu0 0
    %77 = vmatpush.bf16.msra.mxu0 0
    %78 = vmatpush.bf16.msra.mxu0 0
    %79 = vmatpush.bf16.msra.mxu0 0
    %80 = vmatpush.bf16.msra.mxu0 0
    %81 = vmatpush.bf16.msra.mxu0 %v68
    %82 = vmatpush.bf16.msra.mxu0 %v67
    %83 = vmatmul.bf16.gmra.mxu0 %v73
    %v84 = vpop.f32.mrf.mxu0
    %v85 = vadd.f32 0.0, %v84
    %v86 = vpop.f32.mrf.mxu0
    %v87 = vadd.f32 0.0, %v86
    %88 = vdwg.mxu0
    %v91 = vrot.slane %v85, 1
    %v92 = vrot.slane %v87, 1
    %93 = vrot.lane.b32.xlu0 %v91, 120
    %v94 = vpop.permute.xlu0 %93
    %95 = vrot.lane.b32.xlu0 %v92, 120
    %v96 = vpop.permute.xlu0 %95
    %v99 = vadd.f32 %v85, %v94
    %v100 = vadd.f32 %v87, %v96
    %vm101 = vcmask 63488
    %v102 = vsel %vm101, %v99, -inf
    %v103 = vrot.slane %v102, 4
    %v104 = vmax.f32 %v102, %v103
    %v105 = vrot.slane %v104, 2
    %v106 = vmax.f32 %v104, %v105
    %v107 = vrot.slane %v106, 1
    %v108 = vmax.f32 %v106, %v107
    %v109 = vsel %vm101, %v100, -inf
    %v110 = vrot.slane %v109, 4
    %v111 = vmax.f32 %v109, %v110
    %v112 = vrot.slane %v111, 2
    %v113 = vmax.f32 %v111, %v112
    %v114 = vrot.slane %v113, 1
    %v115 = vmax.f32 %v113, %v114
    %v116 = vrot.slane %v85, 2
    %v117 = vrot.slane %v87, 2
    %118 = vrot.lane.b32.xlu0 %v116, 112
    %v119 = vpop.permute.xlu0 %118
    %120 = vrot.lane.b32.xlu0 %v117, 112
    %v121 = vpop.permute.xlu0 %120
    %v124 = vadd.f32 %v99, %v119
    %v125 = vadd.f32 %v100, %v121
    %vm126 = vcmask 193664
    %v127 = vsel %vm126, %v124, -inf
    %v128 = vrot.slane %v127, 4
    %v129 = vmax.f32 %v127, %v128
    %v130 = vrot.slane %v129, 2
    %v131 = vmax.f32 %v129, %v130
    %v132 = vrot.slane %v131, 1
    %v133 = vmax.f32 %v131, %v132
    %v134 = vsel %vm126, %v125, -inf
    %v135 = vrot.slane %v134, 4
    %v136 = vmax.f32 %v134, %v135
    %v137 = vrot.slane %v136, 2
    %v138 = vmax.f32 %v136, %v137
    %v139 = vrot.slane %v138, 1
    %v140 = vmax.f32 %v138, %v139
    %vm143 = vcmask 1041409
    %v144 = vsel %vm143, %v115, %v108
    %v148 = vsel %vm143, %v140, %v133
    %149 = vrot.lane.b32.xlu0 %v148, 120
    %v150 = vpop.permute.xlu0 %149
    %vm152 = vcmask 64512
    %v153 = vsel %vm152, %v144, %v150
    %v154 = vld [vmem:[%s2] sm:$0x1]
    %v156 = vperm.slane %v154, 0
    %v158 = vadd.f32 %v153, %v156
    %v159 = vmax.f32 %v158, 0.0
    %vm160 = vcmask 123904
    %161 = vst.msk [vmem:[#allocation7] sm:$0x3] %vm160, %v159
    // Predicated region
    $region22: #{tpu_custom_call.1} parent=1 // pred_check
      _
    $region23: #{tpu_custom_call.1} parent=1 // pred_check_branch
      %163 = sbr.rel (0) target = $region25
    $region24: #{tpu_custom_call.1} parent=1 // pred_region
      %165 = vsyncadd [#allocation4], 0
      %s167 = sshll.u32 [#allocation7], 4
      %s168 = int_to_ptr.vmem [resolvable:$true] %s167
      %s169 = sshll.u32 %s3, 4
      %s170 = int_to_ptr.hbm [resolvable:$true] %s169
      %172 = dma.vmem_to_hbm [thread:$0]  %s168, 32, %s170, [#allocation4]
    $region25: #{tpu_custom_call.1} parent=1 // pred_fallthru
      _
    // Predicated region
    $region26: #{tpu_custom_call.1} parent=1 // pred_check
      _
    $region27: #{tpu_custom_call.1} parent=1 // pred_check_branch
      %174 = sbr.rel (0) target = $region29
    $region28: #{tpu_custom_call.1} parent=1 // pred_region
      %176 = dma.done [#allocation4], 32
    $region29: #{tpu_custom_call.1} parent=1 // pred_fallthru
      _
    %177 = vsyncpa [#allocation3], 1
    %178 = vsyncpa [#allocation6], 1
    %179 = vsyncpa [#allocation4], 1

</llo_original>
